<compile_context>
chip_gen: v6e
topology: v6e:2x2x1
jax: 0.10.0
libtpu: 0.0.40
codegen_flags: <defaults>
</compile_context>

<pallas_src>
import functools

import jax
import jax.numpy as jnp
from jax.experimental import pallas as pl
from jax.experimental.pallas import tpu as pltpu


def _batch_tile(batch):
    """Largest batch tile that divides B and keeps blocks (8,128)-legal."""
    for tb in (256, 128, 64, 32, 16, 8):
        if batch % tb == 0:
            return tb
    return batch  # block equals the full batch dim -> always legal


# --------------------------------------------------------------------------
# Kernel 1: LSTM recurrence, returns h_T (last hidden state per batch tile).
# --------------------------------------------------------------------------
def _lstm_kernel(x_ref, wih_ref, whh_ref, b_ref, hout_ref, h_scr, c_scr, *, hidden):
    t = pl.program_id(1)

    @pl.when(t == 0)
    def _():
        h_scr[...] = jnp.zeros_like(h_scr)
        c_scr[...] = jnp.zeros_like(c_scr)

    xt = x_ref[0].astype(jnp.float32)          # (TB, F_in) timestep tile
    h_prev = h_scr[...]
    c_prev = c_scr[...]

    # Gates in PyTorch order [i, f, g, o]; 4H == 128 -> one lane width.
    gates = (
        jnp.dot(xt, wih_ref[...], preferred_element_type=jnp.float32)
        + jnp.dot(h_prev, whh_ref[...], preferred_element_type=jnp.float32)
        + b_ref[...]
    )                                          # (TB, 4H)

    i_g = jax.nn.sigmoid(gates[:, 0 * hidden:1 * hidden])
    f_g = jax.nn.sigmoid(gates[:, 1 * hidden:2 * hidden])
    g_g = jnp.tanh(gates[:, 2 * hidden:3 * hidden])
    o_g = jax.nn.sigmoid(gates[:, 3 * hidden:4 * hidden])

    c_new = f_g * c_prev + i_g * g_g
    h_new = o_g * jnp.tanh(c_new)
    c_scr[...] = c_new
    h_scr[...] = h_new

    @pl.when(t == pl.num_programs(1) - 1)
    def _():
        hout_ref[...] = h_new.astype(hout_ref.dtype)


def lstm_last_hidden(x_tbf, wih_t, whh_t, b_gate, *, tb):
    T, B, F_in = x_tbf.shape
    H = whh_t.shape[0]
    nb = B // tb
    kernel = functools.partial(_lstm_kernel, hidden=H)
    return pl.pallas_call(
        kernel,
        out_shape=jax.ShapeDtypeStruct((B, H), jnp.float32),
        grid_spec=pltpu.PrefetchScalarGridSpec(
            num_scalar_prefetch=0,
            grid=(nb, T),
            in_specs=[
                pl.BlockSpec((1, tb, F_in), lambda b, t: (t, b, 0)),  # x[t] tile
                pl.BlockSpec((F_in, 4 * H), lambda b, t: (0, 0)),     # W_ih^T (resident)
                pl.BlockSpec((H, 4 * H), lambda b, t: (0, 0)),        # W_hh^T (resident)
                pl.BlockSpec((1, 4 * H), lambda b, t: (0, 0)),        # b_ih + b_hh
            ],
            out_specs=pl.BlockSpec((tb, H), lambda b, t: (b, 0)),
            scratch_shapes=[
                pltpu.VMEM((tb, H), jnp.float32),   # h carry
                pltpu.VMEM((tb, H), jnp.float32),   # c carry
            ],
        ),
        compiler_params=pltpu.CompilerParams(
            dimension_semantics=("parallel", "arbitrary")),
    )(x_tbf, wih_t, whh_t, b_gate)


# --------------------------------------------------------------------------
# Kernel 2: TFMLP head  Linear->ReLU->(Dropout)->Linear->Sigmoid->Linear(->1)
# --------------------------------------------------------------------------
def _mlp_kernel(h_ref, w1_ref, b1_ref, w2_ref, b2_ref, w3_ref, b3_ref, o_ref,
                *, apply_sigmoid):
    h = h_ref[...].astype(jnp.float32)                                   # (TB, H)
    z1 = jnp.dot(h, w1_ref[...], preferred_element_type=jnp.float32) + b1_ref[...]
    z1 = jnp.maximum(z1, 0.0)                                            # ReLU
    # TODO(synk): nn.Dropout(0.5) is the identity in eval-mode forward;
    # training-mode random masking is not implemented here.
    z2 = jnp.dot(z1, w2_ref[...], preferred_element_type=jnp.float32) + b2_ref[...]
    z2 = jax.nn.sigmoid(z2)                                              # (TB, F2)
    # Final Linear(F2 -> 1): broadcast-multiply + lane reduction (VPU + XLU).
    y = jnp.sum(z2 * w3_ref[...], axis=1, keepdims=True) + b3_ref[...]   # (TB, 1)
    if apply_sigmoid:
        y = jax.nn.sigmoid(y)
    o_ref[...] = y.astype(o_ref.dtype)


def mlp_head(h_last, w1_t, b1, w2_t, b2, w3_row, b3, *, tb, apply_sigmoid):
    B, H = h_last.shape
    F1 = w1_t.shape[1]
    F2 = w2_t.shape[1]
    nb = B // tb
    kernel = functools.partial(_mlp_kernel, apply_sigmoid=apply_sigmoid)
    return pl.pallas_call(
        kernel,
        out_shape=jax.ShapeDtypeStruct((B, 1), jnp.float32),
        grid_spec=pltpu.PrefetchScalarGridSpec(
            num_scalar_prefetch=0,
            grid=(nb,),
            in_specs=[
                pl.BlockSpec((tb, H), lambda b: (b, 0)),
                pl.BlockSpec((H, F1), lambda b: (0, 0)),
                pl.BlockSpec((1, F1), lambda b: (0, 0)),
                pl.BlockSpec((F1, F2), lambda b: (0, 0)),
                pl.BlockSpec((1, F2), lambda b: (0, 0)),
                pl.BlockSpec((1, F2), lambda b: (0, 0)),
                pl.BlockSpec((1, 1), lambda b: (0, 0)),
            ],
            out_specs=pl.BlockSpec((tb, 1), lambda b: (b, 0)),
        ),
        compiler_params=pltpu.CompilerParams(dimension_semantics=("parallel",)),
    )(h_last, w1_t, b1, w2_t, b2, w3_row, b3)


# --------------------------------------------------------------------------
# Full TFLSTM forward.
# --------------------------------------------------------------------------
def tf_lstm_forward(x_in, params, apply_sigmoid=False):
    """x_in: (B, input_features, T), matching the PyTorch module's input."""
    B, F_in, T = x_in.shape
    tb = _batch_tile(B)

    # PyTorch LSTM layout: weight_ih (4H,F_in), weight_hh (4H,H), biases (4H,).
    # Pre-transpose so the kernel computes (TB,F_in)@(F_in,4H) and (TB,H)@(H,4H).
    wih_t = params["weight_ih"].T.astype(jnp.float32)
    whh_t = params["weight_hh"].T.astype(jnp.float32)
    b_gate = (params["bias_ih"] + params["bias_hh"]).reshape(1, -1).astype(jnp.float32)

    # torch.transpose(x, 1, 2) -> (B, T, F_in); we lay it out (T, B, F_in) so
    # each time-grid step DMAs one lane-dense (TB, F_in) tile.
    x_tbf = jnp.transpose(x_in, (2, 0, 1)).astype(jnp.float32)

    h_last = lstm_last_hidden(x_tbf, wih_t, whh_t, b_gate, tb=tb)     # (B, H)

    w1_t = params["fc1_weight"].T.astype(jnp.float32)                 # (H, F1)
    b1 = params["fc1_bias"].reshape(1, -1).astype(jnp.float32)
    w2_t = params["fc2_weight"].T.astype(jnp.float32)                 # (F1, F2)
    b2 = params["fc2_bias"].reshape(1, -1).astype(jnp.float32)
    w3_row = params["fc3_weight"].astype(jnp.float32)                 # (1, F2)
    b3 = params["fc3_bias"].reshape(1, 1).astype(jnp.float32)

    y = mlp_head(h_last, w1_t, b1, w2_t, b2, w3_row, b3, tb=tb,
                 apply_sigmoid=apply_sigmoid)                         # (B, 1)

    # torch .squeeze(): (B, 1) -> (B,), and -> scalar when B == 1.
    y = y[:, 0]
    if B == 1:
        y = y[0]
    return y


# --------------------------------------------------------------------------
# Pure-JAX reference + deterministic params + self-test.
# --------------------------------------------------------------------------
def _ref_forward(x_in, params, apply_sigmoid):
    B, F_in, T = x_in.shape
    H = params["weight_hh"].shape[1]
    xs = jnp.transpose(x_in, (0, 2, 1)).astype(jnp.float32)   # (B, T, F_in)
    h = jnp.zeros((B, H), jnp.float32)
    c = jnp.zeros((B, H), jnp.float32)
    wih = params["weight_ih"].astype(jnp.float32)
    whh = params["weight_hh"].astype(jnp.float32)
    b = (params["bias_ih"] + params["bias_hh"]).astype(jnp.float32)
    for t in range(T):
        g = xs[:, t, :] @ wih.T + h @ whh.T + b
        i = jax.nn.sigmoid(g[:, :H])
        f = jax.nn.sigmoid(g[:, H:2 * H])
        gg = jnp.tanh(g[:, 2 * H:3 * H])
        o = jax.nn.sigmoid(g[:, 3 * H:])
        c = f * c + i * gg
        h = o * jnp.tanh(c)
    z1 = jnp.maximum(h @ params["fc1_weight"].T + params["fc1_bias"], 0.0)
    z2 = jax.nn.sigmoid(z1 @ params["fc2_weight"].T + params["fc2_bias"])
    y = (z2 @ params["fc3_weight"].T + params["fc3_bias"]).squeeze()
    if apply_sigmoid:
        y = jax.nn.sigmoid(y)
    return y


def _init_params(key, input_features, lstm_nodes, fc1_nodes):
    H, F_in, F1 = lstm_nodes, input_features, fc1_nodes
    F2 = F1 // 2
    ks = jax.random.split(key, 10)

    def u(k, shape, fan_in):
        bound = 1.0 / jnp.sqrt(jnp.float32(fan_in))
        return jax.random.uniform(k, shape, jnp.float32, -bound, bound)

    return {
        # PyTorch nn.LSTM init: U(-1/sqrt(H), 1/sqrt(H)); gate order i, f, g, o.
        "weight_ih": u(ks[0], (4 * H, F_in), H),
        "weight_hh": u(ks[1], (4 * H, H), H),
        "bias_ih": u(ks[2], (4 * H,), H),
        "bias_hh": u(ks[3], (4 * H,), H),
        # TFMLP Linear layers: U(-1/sqrt(fan_in), 1/sqrt(fan_in)).
        "fc1_weight": u(ks[4], (F1, H), H),
        "fc1_bias": u(ks[5], (F1,), H),
        "fc2_weight": u(ks[6], (F2, F1), F1),
        "fc2_bias": u(ks[7], (F2,), F1),
        "fc3_weight": u(ks[8], (1, F2), F2),
        "fc3_bias": u(ks[9], (1,), F2),
    }


if __name__ == "__main__":
    key = jax.random.PRNGKey(0)
    kp, kx = jax.random.split(key)

    # Module defaults: input_features=240, lstm_nodes=32, fc1_nodes=1024;
    # small batch=2 and seq=8 for the test.
    B, F_in, T = 2, 240, 8
    H, F1 = 32, 1024

    params = _init_params(kp, F_in, H, F1)
    x = jax.random.normal(kx, (B, F_in, T), dtype=jnp.float32)

    y = tf_lstm_forward(x, params, apply_sigmoid=False)
    y_sig = tf_lstm_forward(x, params, apply_sigmoid=True)
    jax.block_until_ready((y, y_sig))

    y_ref = _ref_forward(x, params, apply_sigmoid=False)
    y_sig_ref = _ref_forward(x, params, apply_sigmoid=True)
    assert jnp.allclose(y, y_ref, atol=1e-4, rtol=1e-4), (y, y_ref)
    assert jnp.allclose(y_sig, y_sig_ref, atol=1e-4, rtol=1e-4), (y_sig, y_sig_ref)

    print("KERNEL_OK")
</pallas_src>

<mosaic_0001>
module attributes {stable_mosaic.version = 11 : i64} {
  func.func @_lstm_kernel(%arg0: i32, %arg1: i32, %arg2: memref<1x2x240xf32, #tpu.memory_space<vmem>>, %arg3: memref<240x128xf32, #tpu.memory_space<vmem>>, %arg4: memref<32x128xf32, #tpu.memory_space<vmem>>, %arg5: memref<1x128xf32, #tpu.memory_space<vmem>>, %arg6: memref<2x32xf32, #tpu.memory_space<vmem>>, %arg7: memref<2x32xf32, #tpu.memory_space<vmem>>, %arg8: memref<2x32xf32, #tpu.memory_space<vmem>>) attributes {dimension_semantics = [#tpu.dimension_semantics<parallel>, #tpu.dimension_semantics<arbitrary>], iteration_bounds = array<i64: 1, 8>, scalar_prefetch = 0 : i64, scratch_operands = 2 : i64, tpu.core_type = #tpu.core_type<tc>, window_params = [{transform_indices = @transform_0, window_bounds = array<i64: 1, 2, 240>}, {pipeline_mode = #tpu.pipeline_mode<synchronous>, transform_indices = @transform_1, window_bounds = array<i64: 240, 128>}, {pipeline_mode = #tpu.pipeline_mode<synchronous>, transform_indices = @transform_2, window_bounds = array<i64: 32, 128>}, {pipeline_mode = #tpu.pipeline_mode<synchronous>, transform_indices = @transform_3, window_bounds = array<i64: 1, 128>}, {transform_indices = @transform_4, window_bounds = array<i64: 2, 32>}]} {
    %c0_i32 = arith.constant 0 : i32
    %0 = arith.cmpi eq, %arg1, %c0_i32 : i32
    %1 = arith.extui %0 : i1 to i32
    %c0_i32_0 = arith.constant 0 : i32
    %2 = arith.cmpi ne, %1, %c0_i32_0 : i32
    scf.if %2 {
      %cst_22 = arith.constant 0.000000e+00 : f32
      %45 = vector.broadcast %cst_22 : f32 to vector<2x32xf32>
      %c0_23 = arith.constant 0 : index
      %c0_24 = arith.constant 0 : index
      %46 = vector.load %arg7[%c0_23, %c0_24] : memref<2x32xf32, #tpu.memory_space<vmem>>, vector<2x32xf32>
      tpu.vector_store %arg7[%c0_23, %c0_24], %45 {strides = array<i32>} : memref<2x32xf32, #tpu.memory_space<vmem>>, vector<2x32xf32>,
      %cst_25 = arith.constant 0.000000e+00 : f32
      %47 = vector.broadcast %cst_25 : f32 to vector<2x32xf32>
      %c0_26 = arith.constant 0 : index
      %c0_27 = arith.constant 0 : index
      %48 = vector.load %arg8[%c0_26, %c0_27] : memref<2x32xf32, #tpu.memory_space<vmem>>, vector<2x32xf32>
      tpu.vector_store %arg8[%c0_26, %c0_27], %47 {strides = array<i32>} : memref<2x32xf32, #tpu.memory_space<vmem>>, vector<2x32xf32>,
    } else {
    }
    %c0 = arith.constant 0 : index
    %c0_1 = arith.constant 0 : index
    %c0_2 = arith.constant 0 : index
    %3 = vector.load %arg2[%c0, %c0_1, %c0_2] : memref<1x2x240xf32, #tpu.memory_space<vmem>>, vector<1x2x240xf32>
    %4 = vector.shape_cast %3 : vector<1x2x240xf32> to vector<2x240xf32>
    %c0_3 = arith.constant 0 : index
    %c0_4 = arith.constant 0 : index
    %5 = vector.load %arg7[%c0_3, %c0_4] : memref<2x32xf32, #tpu.memory_space<vmem>>, vector<2x32xf32>
    %c0_5 = arith.constant 0 : index
    %c0_6 = arith.constant 0 : index
    %6 = vector.load %arg8[%c0_5, %c0_6] : memref<2x32xf32, #tpu.memory_space<vmem>>, vector<2x32xf32>
    %c0_7 = arith.constant 0 : index
    %c0_8 = arith.constant 0 : index
    %7 = vector.load %arg3[%c0_7, %c0_8] : memref<240x128xf32, #tpu.memory_space<vmem>>, vector<240x128xf32>
    %cst = arith.constant dense<0.000000e+00> : vector<2x128xf32>
    %8 = tpu.matmul %4, %7, %cst {dimension_numbers = #tpu.dot_dimension_numbers<[1], [0], [0], [1], [0, 0, 1, 1], [], []>} : vector<2x240xf32>, vector<240x128xf32>, vector<2x128xf32> -> vector<2x128xf32>
    %c0_9 = arith.constant 0 : index
    %c0_10 = arith.constant 0 : index
    %9 = vector.load %arg4[%c0_9, %c0_10] : memref<32x128xf32, #tpu.memory_space<vmem>>, vector<32x128xf32>
    %cst_11 = arith.constant dense<0.000000e+00> : vector<2x128xf32>
    %10 = tpu.matmul %5, %9, %cst_11 {dimension_numbers = #tpu.dot_dimension_numbers<[1], [0], [0], [1], [0, 0, 1, 1], [], []>} : vector<2x32xf32>, vector<32x128xf32>, vector<2x128xf32> -> vector<2x128xf32>
    %11 = arith.addf %8, %10 : vector<2x128xf32>
    %c0_12 = arith.constant 0 : index
    %c0_13 = arith.constant 0 : index
    %12 = vector.load %arg5[%c0_12, %c0_13] : memref<1x128xf32, #tpu.memory_space<vmem>>, vector<1x128xf32>
    %13 = vector.broadcast %12 : vector<1x128xf32> to vector<2x128xf32>
    %14 = arith.addf %11, %13 : vector<2x128xf32>
    %15 = vector.extract_strided_slice %14 {offsets = [0, 0], sizes = [2, 32], strides = [1, 1]} : vector<2x128xf32> to vector<2x32xf32>
    %16 = arith.negf %15 : vector<2x32xf32>
    %17 = math.exp %16 : vector<2x32xf32>
    %cst_14 = arith.constant 1.000000e+00 : f32
    %18 = vector.broadcast %cst_14 : f32 to vector<2x32xf32>
    %19 = arith.addf %18, %17 : vector<2x32xf32>
    %20 = arith.divf %18, %19 : vector<2x32xf32>
    %21 = vector.extract_strided_slice %14 {offsets = [0, 32], sizes = [2, 32], strides = [1, 1]} : vector<2x128xf32> to vector<2x32xf32>
    %22 = arith.negf %21 : vector<2x32xf32>
    %23 = math.exp %22 : vector<2x32xf32>
    %cst_15 = arith.constant 1.000000e+00 : f32
    %24 = vector.broadcast %cst_15 : f32 to vector<2x32xf32>
    %25 = arith.addf %24, %23 : vector<2x32xf32>
    %26 = arith.divf %24, %25 : vector<2x32xf32>
    %27 = vector.extract_strided_slice %14 {offsets = [0, 64], sizes = [2, 32], strides = [1, 1]} : vector<2x128xf32> to vector<2x32xf32>
    %28 = math.tanh %27 : vector<2x32xf32>
    %29 = vector.extract_strided_slice %14 {offsets = [0, 96], sizes = [2, 32], strides = [1, 1]} : vector<2x128xf32> to vector<2x32xf32>
    %30 = arith.negf %29 : vector<2x32xf32>
    %31 = math.exp %30 : vector<2x32xf32>
    %cst_16 = arith.constant 1.000000e+00 : f32
    %32 = vector.broadcast %cst_16 : f32 to vector<2x32xf32>
    %33 = arith.addf %32, %31 : vector<2x32xf32>
    %34 = arith.divf %32, %33 : vector<2x32xf32>
    %35 = arith.mulf %26, %6 : vector<2x32xf32>
    %36 = arith.mulf %20, %28 : vector<2x32xf32>
    %37 = arith.addf %35, %36 : vector<2x32xf32>
    %38 = math.tanh %37 : vector<2x32xf32>
    %39 = arith.mulf %34, %38 : vector<2x32xf32>
    %c0_17 = arith.constant 0 : index
    %c0_18 = arith.constant 0 : index
    %40 = vector.load %arg8[%c0_17, %c0_18] : memref<2x32xf32, #tpu.memory_space<vmem>>, vector<2x32xf32>
    tpu.vector_store %arg8[%c0_17, %c0_18], %37 {strides = array<i32>} : memref<2x32xf32, #tpu.memory_space<vmem>>, vector<2x32xf32>,
    %c0_19 = arith.constant 0 : index
    %c0_20 = arith.constant 0 : index
    %41 = vector.load %arg7[%c0_19, %c0_20] : memref<2x32xf32, #tpu.memory_space<vmem>>, vector<2x32xf32>
    tpu.vector_store %arg7[%c0_19, %c0_20], %39 {strides = array<i32>} : memref<2x32xf32, #tpu.memory_space<vmem>>, vector<2x32xf32>,
    %c7_i32 = arith.constant 7 : i32
    %42 = arith.cmpi eq, %arg1, %c7_i32 : i32
    %43 = arith.extui %42 : i1 to i32
    %c0_i32_21 = arith.constant 0 : i32
    %44 = arith.cmpi ne, %43, %c0_i32_21 : i32
    scf.if %44 {
      %c0_22 = arith.constant 0 : index
      %c0_23 = arith.constant 0 : index
      %45 = vector.load %arg6[%c0_22, %c0_23] : memref<2x32xf32, #tpu.memory_space<vmem>>, vector<2x32xf32>
      tpu.vector_store %arg6[%c0_22, %c0_23], %39 {strides = array<i32>} : memref<2x32xf32, #tpu.memory_space<vmem>>, vector<2x32xf32>,
    } else {
    }
    return
  }
  func.func @transform_0(%arg0: i32, %arg1: i32) -> (i32, i32, i32) {
    %c0_i32 = arith.constant 0 : i32
    %c0_i32_0 = arith.constant 0 : i32
    return %arg1, %arg0, %c0_i32 : i32, i32, i32
  }
  func.func @transform_1(%arg0: i32, %arg1: i32) -> (i32, i32) {
    %c0_i32 = arith.constant 0 : i32
    %c0_i32_0 = arith.constant 0 : i32
    %c0_i32_1 = arith.constant 0 : i32
    return %c0_i32, %c0_i32_0 : i32, i32
  }
  func.func @transform_2(%arg0: i32, %arg1: i32) -> (i32, i32) {
    %c0_i32 = arith.constant 0 : i32
    %c0_i32_0 = arith.constant 0 : i32
    %c0_i32_1 = arith.constant 0 : i32
    return %c0_i32, %c0_i32_0 : i32, i32
  }
  func.func @transform_3(%arg0: i32, %arg1: i32) -> (i32, i32) {
    %c0_i32 = arith.constant 0 : i32
    %c0_i32_0 = arith.constant 0 : i32
    %c0_i32_1 = arith.constant 0 : i32
    return %c0_i32, %c0_i32_0 : i32, i32
  }
  func.func @transform_4(%arg0: i32, %arg1: i32) -> (i32, i32) {
    %c0_i32 = arith.constant 0 : i32
    %c0_i32_0 = arith.constant 0 : i32
    return %arg0, %c0_i32 : i32, i32
  }
}

</mosaic_0001>

<llo_original>
// kernel: tpu_custom_call.1
$region0: #{tpu_custom_call.1}
  #allocation0 [shape = 'u32[]', space=smem, size = 0x4, offset = 0x4, fixed_abs, tag = 'smem constant byte address 0x4 - core index']
  #allocation1 [shape = 'u32[144,128]{1,0:T(1,128)}', space=vmem, size = 0x12000, scoped, tag = 'internal scratch']
  #allocation2 [shape = 'f32[2,32]{1,0:T(2,128)}', space=vmem, size = 0x400, scoped, tag = 'scratch operand']
  #allocation3 [shape = 'f32[2,32]{1,0:T(2,128)}', space=vmem, size = 0x400, scoped, tag = 'scratch operand']
  %s0 = inlined_call_operand.hbm [shape: f32[8,2,240], index: 0, kind: input, shape index: {}]
  %s1 = inlined_call_operand.hbm [shape: f32[240,128], index: 1, kind: input, shape index: {}]
  %s2 = inlined_call_operand.hbm [shape: f32[32,128], index: 2, kind: input, shape index: {}]
  %s3 = inlined_call_operand.vmem [shape: f32[1,128], index: 3, kind: input, shape index: {}]
  %s4 = inlined_call_operand.hbm [shape: f32[2,32], index: 4, kind: output, shape index: {}]
  %s5 = sld [smem:[#allocation0]]
  $region69: #{tpu_custom_call.1} parent=0
    _
  %s7 = ssub.s32 1, %s5
  %s8 = scalar_select 0, %s7, %s5
  $region1: #{tpu_custom_call.1} parent=0
    #allocation4 [shape = 'u8[4096]{0}', space=vmem, size = 0x1000, scoped, tag = 'input window, operand 0']
    #allocation5 [shape = 's32[2]{0}', space=sflag, size = 0x8, scoped, tag = 'scoped memory for tpu_custom_call.1']
    #allocation6 [shape = 's32[2]{0}', space=sflag, size = 0x8, scoped, tag = 'scoped memory for tpu_custom_call.1']
    #allocation7 [shape = 'u8[122880]{0}', space=vmem, size = 0x1e000, scoped, tag = 'input window, operand 1, single buffered']
    #allocation8 [shape = 's32[1]{0}', space=sflag, size = 0x4, scoped, tag = 'scoped memory for tpu_custom_call.1']
    #allocation9 [shape = 'u8[16384]{0}', space=vmem, size = 0x4000, scoped, tag = 'input window, operand 2, single buffered']
    #allocation10 [shape = 'u8[1024]{0}', space=vmem, size = 0x400, scoped, tag = 'output window, operand 0, single buffered']
    %9 = vsyncpa [#allocation5], 0
    %s10 = scalar_lea.sflag [#allocation5], 1
    %11 = vsyncpa %s10, 0
    %12 = vsyncpa [#allocation8], 0
    %13 = vsyncpa [#allocation6], 0
    loop: start=0, step=1, limit=10
    $region2: #{tpu_custom_call.1} parent=1 // loop_pre_header
      _
    $region3: #{tpu_custom_call.1} parent=1 // loop_header
      %s15 = sphi 0, %s19
      %p16 = scmp.ge.s32.totalorder %s15, 10
      %s22 = sphi 0, %s34
      %s23 = sphi 0, %s30
      %s24 = sphi 0, %s22
      %s25 = sphi 0, %s23
      %s26 = sphi 0, %s24
      %s27 = sphi 0, %s25
      %s39 = sphi 0, %s41
      %s42 = sphi 0, %s39
      %s43 = sphi 0, %s42
      %s59 = sphi 0, %s43
      %s63 = sphi 0, %s63
      %s65 = sphi 0, %s63
      %s66 = sphi 0, %s65
      %s80 = sphi 0, %s66
      %s84 = sphi 0, %s84
      %s86 = sphi 0, %s84
      %s87 = sphi 0, %s86
      %s101 = sphi 0, %s87
      %s105 = sphi 0, %s105
      %s107 = sphi 0, %s105
      %s108 = sphi 0, %s107
      %s122 = sphi 0, %s108
      %s128 = sphi 0, %s130
      %s131 = sphi 0, %s128
      %s132 = sphi 0, %s131
      %s148 = sphi 0, %s132
    $region4: #{tpu_custom_call.1} parent=1 // loop_header_branch
      %18 = sbr.rel (%p16) target = $region8
    $region5: #{tpu_custom_call.1} parent=1 // loop_body
      %s20 = ssub.s32 %s15, 1
      %s21 = ssub.s32 %s15, 2
      %s28 = sadd.s32 1, %s23
      %p29 = scmp.ge.s32.totalorder %s28, 8
      %s30 = scalar_select %p29, 0, %s28
      %s31 = sadd.s32 1, %s22
      %s32 = scalar_select %p29, %s31, %s22
      %p33 = scmp.ge.s32.totalorder %s32, 1
      %s34 = scalar_select %p33, 0, %s32
      %s35 = ssub.s32 %s23, %s30
      %s36 = ssub.s32 %s22, %s34
      %s37 = sor.u32 %s35, %s36
      %p38 = scmp.eq.s32.totalorder %s37, 0
      %s40 = sadd.s32 %s39, 1
      %s41 = scalar_select %p38, %s39, %s40
      %p44 = pneg %p38
      %p45 = scmp.eq.s32.totalorder %s15, 7
      %p46 = por %p44, %p45
      %p47 = scmp.ne.s32.totalorder %s39, %s42
      %p48 = scmp.eq.s32.totalorder %s15, 0
      %p49 = por %p47, %p48
      %p50 = scmp.ne.s32.totalorder %s39, %s42
      %p51 = scmp.eq.s32.totalorder %s20, 7
      %p52 = por %p50, %p51
      %p53 = scmp.ne.s32.totalorder %s42, %s43
      %p54 = scmp.eq.s32.totalorder %s20, 0
      %p55 = por %p53, %p54
      %p56 = scmp.ne.s32.totalorder %s42, %s43
      %p57 = scmp.eq.s32.totalorder %s21, 7
      %p58 = por %p56, %p57
      %p60 = scmp.ne.s32.totalorder %s43, %s59
      %p61 = scmp.eq.s32.totalorder %s21, 0
      %p62 = por %p60, %p61
      %s64 = sadd.s32 %s63, 1
      %p67 = scmp.eq.s32.totalorder %s15, 7
      %p68 = scmp.ne.s32.totalorder %s63, %s65
      %p69 = scmp.eq.s32.totalorder %s15, 0
      %p70 = por %p68, %p69
      %p71 = scmp.ne.s32.totalorder %s63, %s65
      %p72 = scmp.eq.s32.totalorder %s20, 7
      %p73 = por %p71, %p72
      %p74 = scmp.ne.s32.totalorder %s65, %s66
      %p75 = scmp.eq.s32.totalorder %s20, 0
      %p76 = por %p74, %p75
      %p77 = scmp.ne.s32.totalorder %s65, %s66
      %p78 = scmp.eq.s32.totalorder %s21, 7
      %p79 = por %p77, %p78
      %p81 = scmp.ne.s32.totalorder %s66, %s80
      %p82 = scmp.eq.s32.totalorder %s21, 0
      %p83 = por %p81, %p82
      %s85 = sadd.s32 %s84, 1
      %p88 = scmp.eq.s32.totalorder %s15, 7
      %p89 = scmp.ne.s32.totalorder %s84, %s86
      %p90 = scmp.eq.s32.totalorder %s15, 0
      %p91 = por %p89, %p90
      %p92 = scmp.ne.s32.totalorder %s84, %s86
      %p93 = scmp.eq.s32.totalorder %s20, 7
      %p94 = por %p92, %p93
      %p95 = scmp.ne.s32.totalorder %s86, %s87
      %p96 = scmp.eq.s32.totalorder %s20, 0
      %p97 = por %p95, %p96
      %p98 = scmp.ne.s32.totalorder %s86, %s87
      %p99 = scmp.eq.s32.totalorder %s21, 7
      %p100 = por %p98, %p99
      %p102 = scmp.ne.s32.totalorder %s87, %s101
      %p103 = scmp.eq.s32.totalorder %s21, 0
      %p104 = por %p102, %p103
      %s106 = sadd.s32 %s105, 1
      %p109 = scmp.eq.s32.totalorder %s15, 7
      %p110 = scmp.ne.s32.totalorder %s105, %s107
      %p111 = scmp.eq.s32.totalorder %s15, 0
      %p112 = por %p110, %p111
      %p113 = scmp.ne.s32.totalorder %s105, %s107
      %p114 = scmp.eq.s32.totalorder %s20, 7
      %p115 = por %p113, %p114
      %p116 = scmp.ne.s32.totalorder %s107, %s108
      %p117 = scmp.eq.s32.totalorder %s20, 0
      %p118 = por %p116, %p117
      %p119 = scmp.ne.s32.totalorder %s107, %s108
      %p120 = scmp.eq.s32.totalorder %s21, 7
      %p121 = por %p119, %p120
      %p123 = scmp.ne.s32.totalorder %s108, %s122
      %p124 = scmp.eq.s32.totalorder %s21, 0
      %p125 = por %p123, %p124
      %s126 = ssub.s32 %s22, %s34
      %p127 = scmp.eq.s32.totalorder %s126, 0
      %s129 = sadd.s32 %s128, 1
      %s130 = scalar_select %p127, %s128, %s129
      %p133 = pneg %p127
      %p134 = scmp.eq.s32.totalorder %s15, 7
      %p135 = por %p133, %p134
      %p136 = scmp.ne.s32.totalorder %s128, %s131
      %p137 = scmp.eq.s32.totalorder %s15, 0
      %p138 = por %p136, %p137
      %p139 = scmp.ne.s32.totalorder %s128, %s131
      %p140 = scmp.eq.s32.totalorder %s20, 7
      %p141 = por %p139, %p140
      %p142 = scmp.ne.s32.totalorder %s131, %s132
      %p143 = scmp.eq.s32.totalorder %s20, 0
      %p144 = por %p142, %p143
      %p145 = scmp.ne.s32.totalorder %s131, %s132
      %p146 = scmp.eq.s32.totalorder %s21, 7
      %p147 = por %p145, %p146
      %p149 = scmp.ne.s32.totalorder %s132, %s148
      %p150 = scmp.eq.s32.totalorder %s21, 0
      %p151 = por %p149, %p150
      %p152 = scmp.le.s32.totalorder 1, %s15
      %p153 = scmp.lt.s32.totalorder %s15, 9
      %p154 = pnand %p152, %p153
      %p155 = pneg %p154
      // Predicated region
      $region9: #{tpu_custom_call.1} parent=5 // pred_check
        _
      $region10: #{tpu_custom_call.1} parent=5 // pred_check_branch
        %157 = sbr.rel (%p154) target = $region12
      $region11: #{tpu_custom_call.1} parent=5 // pred_region
        %s158 = ssub.s32 %s15, 1
        // Predicated region
        $region13: #{tpu_custom_call.1} parent=11 // pred_check
          %p159 = pneg %p76
        $region14: #{tpu_custom_call.1} parent=11 // pred_check_branch
          %161 = sbr.rel (%p159) target = $region16
        $region15: #{tpu_custom_call.1} parent=11 // pred_region
          %s163 = ssub.s32 3840, 3840
          %164 = vsyncadd [#allocation8], %s163
          %s165 = sshll.u32 [#allocation7], 4
          %s166 = int_to_ptr.vmem [resolvable:$true] %s165
          %171 = dma.hbm_to_vmem [thread:$0]  %s1, 3840, %s166, [#allocation8], 128, 128, 8
        $region16: #{tpu_custom_call.1} parent=11 // pred_fallthru
          _
        // Predicated region
        $region17: #{tpu_custom_call.1} parent=11 // pred_check
          %p172 = pneg %p97
        $region18: #{tpu_custom_call.1} parent=11 // pred_check_branch
          %174 = sbr.rel (%p172) target = $region20
        $region19: #{tpu_custom_call.1} parent=11 // pred_region
          %s176 = ssub.s32 512, 512
          %177 = vsyncadd [#allocation8], %s176
          %s178 = sshll.u32 [#allocation9], 4
          %s179 = int_to_ptr.vmem [resolvable:$true] %s178
          %184 = dma.hbm_to_vmem [thread:$0]  %s2, 512, %s179, [#allocation8], 128, 128, 8
        $region20: #{tpu_custom_call.1} parent=11 // pred_fallthru
          _
        // Predicated region
        $region21: #{tpu_custom_call.1} parent=11 // pred_check
          %p185 = pneg %p118
        $region22: #{tpu_custom_call.1} parent=11 // pred_check_branch
          %187 = sbr.rel (%p185) target = $region24
        $region23: #{tpu_custom_call.1} parent=11 // pred_region
          _
        $region24: #{tpu_custom_call.1} parent=11 // pred_fallthru
          _
      $region12: #{tpu_custom_call.1} parent=5 // pred_fallthru
        _
      %p188 = scmp.lt.s32.totalorder %s15, 8
      // Predicated region
      $region25: #{tpu_custom_call.1} parent=5 // pred_check
        %p189 = pneg %p188
      $region26: #{tpu_custom_call.1} parent=5 // pred_check_branch
        %191 = sbr.rel (%p189) target = $region28
      $region27: #{tpu_custom_call.1} parent=5 // pred_region
        // Predicated region
        $region29: #{tpu_custom_call.1} parent=27 // pred_check
          %p192 = pneg %p49
        $region30: #{tpu_custom_call.1} parent=27 // pred_check_branch
          %194 = sbr.rel (%p192) target = $region32
        $region31: #{tpu_custom_call.1} parent=27 // pred_region
          %s195 = sand.u32 %s39, 1
          %s196 = scalar_lea.sflag [#allocation5], %s195
          %s197 = sand.u32 %s39, 1
          %s198 = smul.addr %s197, 4
          %s199 = scalar_lea.vmem [#allocation4], %s198
          %s201 = ssub.s32 64, 64
          %202 = vsyncadd %s196, %s201
          %s203 = smul.addr %s22, 2
          %s204 = smul.addr %s23, 2
          %s205 = sadd.s32 %s203, %s204
          %s206 = smul.addr %s205, 32
          %s207 = scalar_lea.hbm %s0, %s206
          %s209 = sshll.u32 %s199, 4
          %s210 = int_to_ptr.vmem [resolvable:$true] %s209
          %212 = dma.hbm_to_vmem [thread:$0]  %s207, 64, %s210, %s196
        $region32: #{tpu_custom_call.1} parent=27 // pred_fallthru
          _
      $region28: #{tpu_custom_call.1} parent=5 // pred_fallthru
        _
      %p213 = scmp.le.s32.totalorder 1, %s15
      %p214 = scmp.lt.s32.totalorder %s15, 9
      %p215 = pnand %p213, %p214
      %p216 = pneg %p215
      // Predicated region
      $region33: #{tpu_custom_call.1} parent=5 // pred_check
        _
      $region34: #{tpu_custom_call.1} parent=5 // pred_check_branch
        %218 = sbr.rel (%p215) target = $region36
      $region35: #{tpu_custom_call.1} parent=5 // pred_region
        %s219 = ssub.s32 %s15, 1
        %s220 = sand.u32 %s42, 1
        %s221 = scalar_lea.sflag [#allocation5], %s220
        %s222 = sand.u32 %s42, 1
        %s223 = smul.addr %s222, 4
        %s224 = scalar_lea.vmem [#allocation4], %s223
        // Predicated region
        $region37: #{tpu_custom_call.1} parent=35 // pred_check
          %p225 = pneg %p55
        $region38: #{tpu_custom_call.1} parent=35 // pred_check_branch
          %227 = sbr.rel (%p225) target = $region40
        $region39: #{tpu_custom_call.1} parent=35 // pred_region
          %228 = dma.done %s221, 64
        $region40: #{tpu_custom_call.1} parent=35 // pred_fallthru
          _
        // Predicated region
        $region41: #{tpu_custom_call.1} parent=35 // pred_check
          %p229 = pneg %p76
        $region42: #{tpu_custom_call.1} parent=35 // pred_check_branch
          %231 = sbr.rel (%p229) target = $region44
        $region43: #{tpu_custom_call.1} parent=35 // pred_region
          %232 = dma.done [#allocation8], 3840
        $region44: #{tpu_custom_call.1} parent=35 // pred_fallthru
          _
        // Predicated region
        $region45: #{tpu_custom_call.1} parent=35 // pred_check
          %p233 = pneg %p97
        $region46: #{tpu_custom_call.1} parent=35 // pred_check_branch
          %235 = sbr.rel (%p233) target = $region48
        $region47: #{tpu_custom_call.1} parent=35 // pred_region
          %236 = dma.done [#allocation8], 512
        $region48: #{tpu_custom_call.1} parent=35 // pred_fallthru
          _
        %s237 = sand.u32 %s42, 1
        %s238 = scalar_lea.sflag [#allocation5], %s237
        %s239 = sand.u32 %s42, 1
        %s240 = smul.addr %s239, 4
        %s241 = scalar_lea.vmem [#allocation4], %s240
        %p242 = pneg %p55
        %p243 = pneg %p52
        %p244 = pneg %p76
        %p245 = pneg %p73
        %p246 = pneg %p97
        %p247 = pneg %p94
        %p248 = pneg %p118
        %p249 = pneg %p115
        %p250 = pneg %p144
        %p251 = pneg %p141
        %p252 = scmp.eq.s32.totalorder %s25, 0
        // Predicated region
        $region49: #{tpu_custom_call.1} parent=35 // pred_check
          %p253 = pneg %p252
        $region50: #{tpu_custom_call.1} parent=35 // pred_check_branch
          %255 = sbr.rel (%p253) target = $region52
        $region51: #{tpu_custom_call.1} parent=35 // pred_region
          %vm256 = vcmask 254976
          %257 = vst.msk [vmem:[#allocation2] sm:$0x3] %vm256, 0.0
          %258 = vst.msk [vmem:[#allocation3] sm:$0x3] %vm256, 0.0
        $region52: #{tpu_custom_call.1} parent=35 // pred_fallthru
          _
        %v259 = vld [vmem:[%s224] sm:$0xf]
        %v260 = vld [vmem:[#allocation2] sm:$0x3]
        %v261 = vld [vmem:[#allocation3] sm:$0x3]
        %v262 = vld [vmem:[#allocation7] sm:$0xff]
        %v263 = vld [vmem:[#allocation7 + $0x8] sm:$0xff]
        %v264 = vld [vmem:[#allocation7 + $0x10] sm:$0xff]
        %v265 = vld [vmem:[#allocation7 + $0x18] sm:$0xff]
        %v266 = vld [vmem:[#allocation7 + $0x20] sm:$0xff]
        %v267 = vld [vmem:[#allocation7 + $0x28] sm:$0xff]
        %v268 = vld [vmem:[#allocation7 + $0x30] sm:$0xff]
        %v269 = vld [vmem:[#allocation7 + $0x38] sm:$0xff]
        %v270 = vld [vmem:[#allocation7 + $0x40] sm:$0xff]
        %v271 = vld [vmem:[#allocation7 + $0x48] sm:$0xff]
        %v272 = vld [vmem:[#allocation7 + $0x50] sm:$0xff]
        %v273 = vld [vmem:[#allocation7 + $0x58] sm:$0xff]
        %v274 = vld [vmem:[#allocation7 + $0x60] sm:$0xff]
        %v275 = vld [vmem:[#allocation7 + $0x68] sm:$0xff]
        %v276 = vld [vmem:[#allocation7 + $0x70] sm:$0xff]
        %v277 = vld [vmem:[#allocation7 + $0x78] sm:$0xff]
        %v278 = vld [vmem:[#allocation7 + $0x80] sm:$0xff]
        %v279 = vld [vmem:[#allocation7 + $0x88] sm:$0xff]
        %v280 = vld [vmem:[#allocation7 + $0x90] sm:$0xff]
        %v281 = vld [vmem:[#allocation7 + $0x98] sm:$0xff]
        %v282 = vld [vmem:[#allocation7 + $0xa0] sm:$0xff]
        %v283 = vld [vmem:[#allocation7 + $0xa8] sm:$0xff]
        %v284 = vld [vmem:[#allocation7 + $0xb0] sm:$0xff]
        %v285 = vld [vmem:[#allocation7 + $0xb8] sm:$0xff]
        %v286 = vld [vmem:[#allocation7 + $0xc0] sm:$0xff]
        %v287 = vld [vmem:[#allocation7 + $0xc8] sm:$0xff]
        %v288 = vld [vmem:[#allocation7 + $0xd0] sm:$0xff]
        %v289 = vld [vmem:[#allocation7 + $0xd8] sm:$0xff]
        %v290 = vld [vmem:[#allocation7 + $0xe0] sm:$0xff]
        %v291 = vld [vmem:[#allocation7 + $0xe8] sm:$0xff]
        %v292 = vld [vmem:[#allocation9] sm:$0xff]
        %v293 = vld [vmem:[#allocation9 + $0x8] sm:$0xff]
        %v294 = vld [vmem:[#allocation9 + $0x10] sm:$0xff]
        %v295 = vld [vmem:[#allocation9 + $0x18] sm:$0xff]
        %vm296 = vcmask 261120
        %v298 = vsel %vm296, %v260, 0
        %300 = vmatprep.subr.mxu0 0.0
        %301 = vmatpush1.msra.mxu0 0.0
        %302 = vmatprep.subr.mxu0 0.0
        %303 = vmatpush1.msra.mxu0 0.0
        %304 = vmatprep.subr.mxu0 0.0
        %305 = vmatpush1.msra.mxu0 0.0
        %306 = vmatprep.subr.mxu0 0.0
        %307 = vmatpush1.msra.mxu0 0.0
        %308 = vmatprep.subr.mxu0 0.0
        %309 = vmatpush1.msra.mxu0 0.0
        %310 = vmatprep.subr.mxu0 0.0
        %311 = vmatpush1.msra.mxu0 0.0
        %312 = vmatprep.subr.mxu0 0.0
        %313 = vmatpush1.msra.mxu0 0.0
        %314 = vmatprep.subr.mxu0 0.0
        %315 = vmatpush1.msra.mxu0 0.0
        %316 = vmatprep.subr.mxu0 0.0
        %317 = vmatpush1.msra.mxu0 0.0
        %318 = vmatprep.subr.mxu0 0.0
        %319 = vmatpush1.msra.mxu0 0.0
        %320 = vmatprep.subr.mxu0 0.0
        %321 = vmatpush1.msra.mxu0 0.0
        %322 = vmatprep.subr.mxu0 0.0
        %323 = vmatpush1.msra.mxu0 0.0
        %324 = vmatprep.subr.mxu0 0.0
        %325 = vmatpush1.msra.mxu0 %v295
        %326 = vmatprep.subr.mxu0 0.0
        %327 = vmatpush1.msra.mxu0 %v294
        %328 = vmatprep.subr.mxu0 0.0
        %329 = vmatpush1.msra.mxu0 %v293
        %330 = vmatprep.subr.mxu0 0.0
        %331 = vmatpush1.msra.mxu0 %v292
        %332 = vmatprep.subr.mxu0 0.0
        %333 = vmatpush2.msra.mxu0 0.0
        %334 = vmatprep.subr.mxu0 0.0
        %335 = vmatpush2.msra.mxu0 0.0
        %336 = vmatprep.subr.mxu0 0.0
        %337 = vmatpush2.msra.mxu0 0.0
        %338 = vmatprep.subr.mxu0 0.0
        %339 = vmatpush2.msra.mxu0 0.0
        %340 = vmatprep.subr.mxu0 0.0
        %341 = vmatpush2.msra.mxu0 0.0
        %342 = vmatprep.subr.mxu0 0.0
        %343 = vmatpush2.msra.mxu0 0.0
        %344 = vmatprep.subr.mxu0 0.0
        %345 = vmatpush2.msra.mxu0 0.0
        %346 = vmatprep.subr.mxu0 0.0
        %347 = vmatpush2.msra.mxu0 0.0
        %348 = vmatprep.subr.mxu0 0.0
        %349 = vmatpush2.msra.mxu0 0.0
        %350 = vmatprep.subr.mxu0 0.0
        %351 = vmatpush2.msra.mxu0 0.0
        %352 = vmatprep.subr.mxu0 0.0
        %353 = vmatpush2.msra.mxu0 0.0
        %354 = vmatprep.subr.mxu0 0.0
        %355 = vmatpush2.msra.mxu0 0.0
        %356 = vmatprep.subr.mxu0 0.0
        %357 = vmatpush2.msra.mxu0 0.0
        %358 = vmatprep.subr.mxu0 0.0
        %359 = vmatpush2.msra.mxu0 0.0
        %360 = vmatprep.subr.mxu0 0.0
        %361 = vmatpush2.msra.mxu0 0.0
        %362 = vmatprep.subr.mxu0 0.0
        %363 = vmatpush2.msra.mxu0 0.0
        %364 = vmatprep.mubr.f32.mxu0 0.0
        %365 = vmatmul.mubr.f32.gmra.mxu0 %v298
        %v366 = vpop.f32.mrf.mxu0
        %v367 = vadd.f32 0.0, %v366
        %v368 = vpop.f32.mrf.mxu0
        %369 = vdwg.mxu0
        %v372 = vunpack.c.l.s4 1983009808
        %v373 = vunpack.c.0.s8 %v372
        %v374 = vlaneseq
        %v375 = vshrl.u32 %v374, 7
        %v376 = vsub.s32 %v373, %v375
        %v377 = vrot.slane %v259, %v376
        %v378 = vcombine.high %v377, %v377
        %vm380 = vcmask 916480
        %v381 = vsel %vm380, %v378, 0
        %383 = vmatprep.subr.mxu0 0.0
        %384 = vmatpush1.msra.mxu0 %v277
        %385 = vmatprep.subr.mxu0 0.0
        %386 = vmatpush1.msra.mxu0 %v276
        %387 = vmatprep.subr.mxu0 0.0
        %388 = vmatpush1.msra.mxu0 %v275
        %389 = vmatprep.subr.mxu0 0.0
        %390 = vmatpush1.msra.mxu0 %v274
        %391 = vmatprep.subr.mxu0 0.0
        %392 = vmatpush1.msra.mxu0 %v273
        %393 = vmatprep.subr.mxu0 0.0
        %394 = vmatpush1.msra.mxu0 %v272
        %395 = vmatprep.subr.mxu0 0.0
        %396 = vmatpush1.msra.mxu0 %v271
        %397 = vmatprep.subr.mxu0 0.0
        %398 = vmatpush1.msra.mxu0 %v270
        %399 = vmatprep.subr.mxu0 0.0
        %400 = vmatpush1.msra.mxu0 %v269
        %401 = vmatprep.subr.mxu0 0.0
        %402 = vmatpush1.msra.mxu0 %v268
        %403 = vmatprep.subr.mxu0 0.0
        %404 = vmatpush1.msra.mxu0 %v267
        %405 = vmatprep.subr.mxu0 0.0
        %406 = vmatpush1.msra.mxu0 %v266
        %407 = vmatprep.subr.mxu0 0.0
        %408 = vmatpush1.msra.mxu0 %v265
        %409 = vmatprep.subr.mxu0 0.0
        %410 = vmatpush1.msra.mxu0 %v264
        %411 = vmatprep.subr.mxu0 0.0
        %412 = vmatpush1.msra.mxu0 %v263
        %413 = vmatprep.subr.mxu0 0.0
        %414 = vmatpush1.msra.mxu0 %v262
        %415 = vmatprep.subr.mxu0 0.0
        %416 = vmatpush2.msra.mxu0 0.0
        %417 = vmatprep.subr.mxu0 0.0
        %418 = vmatpush2.msra.mxu0 0.0
        %419 = vmatprep.subr.mxu0 0.0
        %420 = vmatpush2.msra.mxu0 %v291
        %421 = vmatprep.subr.mxu0 0.0
        %422 = vmatpush2.msra.mxu0 %v290
        %423 = vmatprep.subr.mxu0 0.0
        %424 = vmatpush2.msra.mxu0 %v289
        %425 = vmatprep.subr.mxu0 0.0
        %426 = vmatpush2.msra.mxu0 %v288
        %427 = vmatprep.subr.mxu0 0.0
        %428 = vmatpush2.msra.mxu0 %v287
        %429 = vmatprep.subr.mxu0 0.0
        %430 = vmatpush2.msra.mxu0 %v286
        %431 = vmatprep.subr.mxu0 0.0
        %432 = vmatpush2.msra.mxu0 %v285
        %433 = vmatprep.subr.mxu0 0.0
        %434 = vmatpush2.msra.mxu0 %v284
        %435 = vmatprep.subr.mxu0 0.0
        %436 = vmatpush2.msra.mxu0 %v283
        %437 = vmatprep.subr.mxu0 0.0
        %438 = vmatpush2.msra.mxu0 %v282
        %439 = vmatprep.subr.mxu0 0.0
        %440 = vmatpush2.msra.mxu0 %v281
        %441 = vmatprep.subr.mxu0 0.0
        %442 = vmatpush2.msra.mxu0 %v280
        %443 = vmatprep.subr.mxu0 0.0
        %444 = vmatpush2.msra.mxu0 %v279
        %445 = vmatprep.subr.mxu0 0.0
        %446 = vmatpush2.msra.mxu0 %v278
        %447 = vmatprep.mubr.f32.mxu0 %v381
        %448 = vmatmul.mubr.f32.gmra.mxu0 %v377
        %v449 = vpop.f32.mrf.mxu0
        %v450 = vadd.f32 %v367, %v449
        %v451 = vpop.f32.mrf.mxu0
        %452 = vdwg.mxu0
        %v453 = vld [vmem:[%s3] sm:$0x1]
        %v455 = vlaneseq
        %v456 = vshrl.u32 %v455, 7
        %v457 = vsub.s32 0, %v456
        %v458 = vrot.slane %v453, %v457
        %v460 = vadd.f32 %v450, %v458
        %v461 = vxor.u32 %v460, 2147483648
        %v462 = vmul.f32 %v461, 1.442695
        %v463 = vpow.pop %v462
        %v464 = vadd.f32 %v463, 1.0
        %v465 = vrcp.pop %v464
        %v466 = vmul.f32 1.0, %v465
        %v467 = vtanh.pop %v460
        %469 = vrot.lane.b32.xlu0 %v261, 32
        %v470 = vpop.permute.xlu0 %469
        %v472 = vmul.f32 %v466, %v470
        %474 = vrot.lane.b32.xlu0 %v467, 64
        %v475 = vpop.permute.xlu0 %474
        %v477 = vmul.f32 %v466, %v475
        %479 = vrot.lane.b32.xlu0 %v477, 32
        %v480 = vpop.permute.xlu0 %479
        %v482 = vadd.f32 %v472, %v480
        %v483 = vtanh.pop %v482
        %485 = vrot.lane.b32.xlu0 %v483, 64
        %v486 = vpop.permute.xlu0 %485
        %v488 = vmul.f32 %v466, %v486
        %490 = vrot.lane.b32.xlu0 %v482, 96
        %v491 = vpop.permute.xlu0 %490
        %vm493 = vcmask 254976
        %494 = vst.msk [vmem:[#allocation3] sm:$0x3] %vm493, %v491
        %496 = vrot.lane.b32.xlu0 %v488, 32
        %v497 = vpop.permute.xlu0 %496
        %499 = vst.msk [vmem:[#allocation2] sm:$0x3] %vm493, %v497
        %p500 = scmp.eq.s32.totalorder %s25, 7
        // Predicated region
        $region53: #{tpu_custom_call.1} parent=35 // pred_check
          %p501 = pneg %p500
        $region54: #{tpu_custom_call.1} parent=35 // pred_check_branch
          %503 = sbr.rel (%p501) target = $region56
        $region55: #{tpu_custom_call.1} parent=35 // pred_region
          %504 = vst.msk [vmem:[#allocation10] sm:$0x3] %vm493, %v497
        $region56: #{tpu_custom_call.1} parent=35 // pred_fallthru
          _
        // Predicated region
        $region57: #{tpu_custom_call.1} parent=35 // pred_check
          %p505 = pneg %p141
        $region58: #{tpu_custom_call.1} parent=35 // pred_check_branch
          %507 = sbr.rel (%p505) target = $region60
        $region59: #{tpu_custom_call.1} parent=35 // pred_region
          %s509 = ssub.s32 32, 32
          %510 = vsyncadd [#allocation6], %s509
          %s511 = smul.addr %s24, 32
          %s512 = scalar_lea.hbm %s4, %s511
          %s514 = sshll.u32 [#allocation10], 4
          %s515 = int_to_ptr.vmem [resolvable:$true] %s514
          %517 = dma.vmem_to_hbm [thread:$0]  %s515, 32, %s512, [#allocation6]
        $region60: #{tpu_custom_call.1} parent=35 // pred_fallthru
          _
        // Predicated region
        $region61: #{tpu_custom_call.1} parent=35 // pred_check
          %p518 = pneg %p141
        $region62: #{tpu_custom_call.1} parent=35 // pred_check_branch
          %520 = sbr.rel (%p518) target = $region64
        $region63: #{tpu_custom_call.1} parent=35 // pred_region
          %521 = dma.done [#allocation6], 32
        $region64: #{tpu_custom_call.1} parent=35 // pred_fallthru
          _
      $region36: #{tpu_custom_call.1} parent=5 // pred_fallthru
        _
      %p522 = scmp.le.s32.totalorder 2, %s15
      // Predicated region
      $region65: #{tpu_custom_call.1} parent=5 // pred_check
        %p523 = pneg %p522
      $region66: #{tpu_custom_call.1} parent=5 // pred_check_branch
        %525 = sbr.rel (%p523) target = $region68
      $region67: #{tpu_custom_call.1} parent=5 // pred_region
        %s526 = ssub.s32 %s15, 2
      $region68: #{tpu_custom_call.1} parent=5 // pred_fallthru
        _
    $region6: #{tpu_custom_call.1} parent=1 // loop_footer
      %s19 = sadd.s32 1, %s15
    $region7: #{tpu_custom_call.1} parent=1 // loop_footer_branch
      %14 = sbr.rel target = $region3
    $region8: #{tpu_custom_call.1} parent=1 // loop_exit
      _
    %527 = vsyncpa [#allocation5], 1
    %s528 = scalar_lea.sflag [#allocation5], 1
    %529 = vsyncpa %s528, 1
    %530 = vsyncpa [#allocation8], 1
    %531 = vsyncpa [#allocation6], 1
    %s532 = scalar_lea.sflag [#allocation6], 1
    %533 = vsyncpa %s532, 1

</llo_original>
